<compile_context>
chip_gen: v7x
topology: tpu7x:2x2x1
jax: 0.10.0
libtpu: 0.0.40
codegen_flags: <defaults>
</compile_context>

<pallas_src>
import functools

import jax
import jax.numpy as jnp
from jax.experimental import pallas as pl
from jax.experimental.pallas import tpu as pltpu

GAMMA = 2
EPS = 1e-07   # present in the module's __init__ but unused in its forward
_SPLIT = 2    # leading "parallel" axis: 2 TensorCores on v7x, harmless elsewhere


def _choose_block_n(n, c, itemsize, target_bytes=2 * 1024 * 1024, max_rows=8192):
    """Rows per tile: ~2 MiB per pipeline buffer, multiple of 8 sublanes, <= N."""
    if n < 8:
        return n                       # tiny batch: single full-extent block
    bn = target_bytes // (itemsize * c)
    bn = max(8, (min(bn, max_rows) // 8) * 8)
    return min(bn, (n // 8) * 8)


def _focal_ce_kernel(logits_ref, target_ref, out_ref, *, block_n, bps, n_true):
    # TODO(synk): for vocab-scale C (>= ~8K) also tile the class axis with an
    # online (flash-style) max/LSE + target-logit accumulator.
    s = pl.program_id(0)   # core-split index ("parallel")
    i = pl.program_id(1)   # row-block index within the split ("arbitrary")

    @pl.when(i == 0)
    def _init():
        out_ref[...] = jnp.zeros_like(out_ref)

    x = logits_ref[...].astype(jnp.float32)           # (BLOCK_N, C) f32 math
    t = target_ref[...]                               # (BLOCK_N, 1) int32

    # Row-wise numerically-stable LSE and target-logit gather. Both reductions
    # are taken over the same shifted tile `xm` so the data is swept, not
    # re-derived, by the two passes.
    m = jnp.max(x, axis=-1, keepdims=True)            # (BLOCK_N, 1)
    xm = x - m
    col = jax.lax.broadcasted_iota(jnp.int32, x.shape, 1)
    sum_e = jnp.sum(jnp.exp(xm), axis=-1, keepdims=True)
    tgt_xm = jnp.sum(jnp.where(col == t, xm, 0.0), axis=-1, keepdims=True)
    ce = jnp.log(sum_e) - tgt_xm                      # (BLOCK_N, 1) per-row CE

    # Mask padded / clamped rows using the *intended* global row index.
    row0 = (s * bps + i) * block_n
    rows = row0 + jax.lax.broadcasted_iota(jnp.int32, ce.shape, 0)
    ce_sum = jnp.sum(jnp.where(rows < n_true, ce, 0.0), keepdims=True)  # (1, 1)

    out_ref[0:1, 0:1] += ce_sum


def focal_loss(logits, target, *, gamma=GAMMA, block_n=None):
    """logits: [N, C] floats, target: [N] integer class indices -> scalar loss."""
    n, c = logits.shape

    # DMA narrow: ship logits as bf16 (ideally callers pass bf16 directly).
    if jnp.issubdtype(logits.dtype, jnp.floating) and logits.dtype.itemsize > 2:
        logits = logits.astype(jnp.bfloat16)
    target_2d = target.astype(jnp.int32).reshape(n, 1)

    if block_n is None:
        block_n = _choose_block_n(n, c, logits.dtype.itemsize)
    total_blocks = pl.cdiv(n, block_n)
    bps = pl.cdiv(total_blocks, _SPLIT)               # row blocks per core split

    def row_block(s, i):
        # Clamp so padded grid steps re-read a valid block; their rows are masked.
        return jnp.minimum(s * bps + i, total_blocks - 1)

    kernel = functools.partial(
        _focal_ce_kernel, block_n=block_n, bps=bps, n_true=n)

    cost = pl.CostEstimate(
        flops=6 * n * c,
        transcendentals=n * c,
        bytes_accessed=n * c * logits.dtype.itemsize + n * 4 + _SPLIT * 8 * 128 * 4,
    )

    partials = pl.pallas_call(
        kernel,
        out_shape=jax.ShapeDtypeStruct((_SPLIT * 8, 128), jnp.float32),
        grid_spec=pltpu.PrefetchScalarGridSpec(
            num_scalar_prefetch=0,
            grid=(_SPLIT, bps),
            in_specs=[
                pl.BlockSpec((block_n, c), lambda s, i: (row_block(s, i), 0)),
                pl.BlockSpec((block_n, 1), lambda s, i: (row_block(s, i), 0)),
            ],
            out_specs=pl.BlockSpec((8, 128), lambda s, i: (s, 0)),
        ),
        compiler_params=pltpu.CompilerParams(
            dimension_semantics=("parallel", "arbitrary"),
            vmem_limit_bytes=32 * 1024 * 1024,
        ),
        cost_estimate=cost,
    )(logits, target_2d)

    # Finalize: combine per-core partial CE sums, take the mean over the true
    # batch size, then apply the scalar focal modulation (exactly the module).
    logp = jnp.sum(partials.reshape(_SPLIT, 8, 128)[:, 0, 0]) / jnp.float32(n)
    p = jnp.exp(-logp)
    return (1.0 - p) ** gamma * logp


def _reference_focal_loss(logits, target, gamma=GAMMA):
    logprobs = jax.nn.log_softmax(logits.astype(jnp.float32), axis=-1)
    ce = -jnp.take_along_axis(logprobs, target[:, None].astype(jnp.int32), axis=-1)
    logp = jnp.mean(ce)
    p = jnp.exp(-logp)
    return (1.0 - p) ** gamma * logp


if __name__ == "__main__":
    key = jax.random.PRNGKey(0)
    k1, k2, k3, k4 = jax.random.split(key, 4)

    # Small classification problem: batch of 64 samples, 10 classes.
    N, C = 64, 10
    logits = jax.random.normal(k1, (N, C), dtype=jnp.float32)
    target = jax.random.randint(k2, (N,), 0, C, dtype=jnp.int32)

    out = jax.block_until_ready(focal_loss(logits, target))

    # Reference on the same bf16-quantized logits the kernel DMAs.
    logits_q = logits.astype(jnp.bfloat16).astype(jnp.float32)
    ref = _reference_focal_loss(logits_q, target)
    assert jnp.allclose(out, ref, atol=1e-5, rtol=1e-5), (out, ref)

    # Ragged batch + forced small tile: exercises partial edge blocks, clamped
    # grid steps on the second core split, and the true-N divisor.
    N2, C2 = 20, 16
    logits2 = jax.random.normal(k3, (N2, C2), dtype=jnp.float32)
    target2 = jax.random.randint(k4, (N2,), 0, C2, dtype=jnp.int32)
    out2 = jax.block_until_ready(focal_loss(logits2, target2, block_n=8))
    ref2 = _reference_focal_loss(
        logits2.astype(jnp.bfloat16).astype(jnp.float32), target2)
    assert jnp.allclose(out2, ref2, atol=1e-5, rtol=1e-5), (out2, ref2)

    print("KERNEL_OK")
</pallas_src>

<mosaic_0001>
module attributes {stable_mosaic.version = 11 : i64} {
  func.func @_focal_ce_kernel(%arg0: i32, %arg1: i32, %arg2: memref<64x10xbf16, #tpu.memory_space<vmem>>, %arg3: memref<64x1xi32, #tpu.memory_space<vmem>>, %arg4: memref<8x128xf32, #tpu.memory_space<vmem>>) attributes {dimension_semantics = [#tpu.dimension_semantics<parallel>, #tpu.dimension_semantics<arbitrary>], iteration_bounds = array<i64: 2, 1>, scalar_prefetch = 0 : i64, scratch_operands = 0 : i64, tpu.core_type = #tpu.core_type<tc>, window_params = [{transform_indices = @transform_0, window_bounds = array<i64: 64, 10>}, {transform_indices = @transform_1, window_bounds = array<i64: 64, 1>}, {transform_indices = @transform_2, window_bounds = array<i64: 8, 128>}]} {
    %c0_i32 = arith.constant 0 : i32
    %0 = arith.cmpi eq, %arg1, %c0_i32 : i32
    %1 = arith.extui %0 : i1 to i32
    %c0_i32_0 = arith.constant 0 : i32
    %2 = arith.cmpi ne, %1, %c0_i32_0 : i32
    scf.if %2 {
      %cst_14 = arith.constant 0.000000e+00 : f32
      %40 = vector.broadcast %cst_14 : f32 to vector<8x128xf32>
      %c0_15 = arith.constant 0 : index
      %c0_16 = arith.constant 0 : index
      %41 = vector.load %arg4[%c0_15, %c0_16] : memref<8x128xf32, #tpu.memory_space<vmem>>, vector<8x128xf32>
      tpu.vector_store %arg4[%c0_15, %c0_16], %40 {strides = array<i32>} : memref<8x128xf32, #tpu.memory_space<vmem>>, vector<8x128xf32>,
    } else {
    }
    %c0 = arith.constant 0 : index
    %c0_1 = arith.constant 0 : index
    %3 = vector.load %arg2[%c0, %c0_1] : memref<64x10xbf16, #tpu.memory_space<vmem>>, vector<64x10xbf16>
    %4 = arith.extf %3 : vector<64x10xbf16> to vector<64x10xf32>
    %c0_2 = arith.constant 0 : index
    %c0_3 = arith.constant 0 : index
    %5 = vector.load %arg3[%c0_2, %c0_3] : memref<64x1xi32, #tpu.memory_space<vmem>>, vector<64x1xi32>
    %cst = arith.constant dense<0xFF800000> : vector<64xf32>
    %6 = vector.multi_reduction <maximumf>, %4, %cst [1] : vector<64x10xf32> to vector<64xf32>
    %7 = vector.shape_cast %6 : vector<64xf32> to vector<64x1xf32>
    %8 = vector.broadcast %7 : vector<64x1xf32> to vector<64x10xf32>
    %9 = arith.subf %4, %8 : vector<64x10xf32>
    %10 = tpu.iota {dimensions = array<i32: 1>} : vector<64x10xi32>
    %11 = math.exp %9 : vector<64x10xf32>
    %cst_4 = arith.constant dense<0.000000e+00> : vector<64xf32>
    %12 = vector.multi_reduction <add>, %11, %cst_4 [1] : vector<64x10xf32> to vector<64xf32>
    %13 = vector.shape_cast %12 : vector<64xf32> to vector<64x1xf32>
    %14 = vector.broadcast %5 : vector<64x1xi32> to vector<64x10xi32>
    %15 = arith.cmpi eq, %10, %14 : vector<64x10xi32>
    %cst_5 = arith.constant 0.000000e+00 : f32
    %16 = vector.broadcast %cst_5 : f32 to vector<64x10xf32>
    %17 = arith.select %15, %9, %16 : vector<64x10xi1>, vector<64x10xf32>
    %cst_6 = arith.constant dense<0.000000e+00> : vector<64xf32>
    %18 = vector.multi_reduction <add>, %17, %cst_6 [1] : vector<64x10xf32> to vector<64xf32>
    %19 = vector.shape_cast %18 : vector<64xf32> to vector<64x1xf32>
    %20 = math.log %13 : vector<64x1xf32>
    %21 = arith.subf %20, %19 : vector<64x1xf32>
    %c1_i32 = arith.constant 1 : i32
    %22 = arith.muli %arg0, %c1_i32 : i32
    %23 = arith.addi %22, %arg1 : i32
    %c64_i32 = arith.constant 64 : i32
    %24 = arith.muli %23, %c64_i32 : i32
    %25 = tpu.iota {dimensions = array<i32: 0>} : vector<64x1xi32>
    %26 = vector.broadcast %24 : i32 to vector<64x1xi32>
    %27 = arith.addi %26, %25 : vector<64x1xi32>
    %c64_i32_7 = arith.constant 64 : i32
    %28 = vector.broadcast %c64_i32_7 : i32 to vector<64x1xi32>
    %29 = arith.cmpi slt, %27, %28 : vector<64x1xi32>
    %cst_8 = arith.constant 0.000000e+00 : f32
    %30 = vector.broadcast %cst_8 : f32 to vector<64x1xf32>
    %31 = arith.select %29, %21, %30 : vector<64x1xi1>, vector<64x1xf32>
    %32 = vector.shape_cast %31 : vector<64x1xf32> to vector<1x64x1xf32>
    %cst_9 = arith.constant dense<0.000000e+00> : vector<1xf32>
    %33 = vector.multi_reduction <add>, %32, %cst_9 [1, 2] : vector<1x64x1xf32> to vector<1xf32>
    %34 = vector.shape_cast %33 : vector<1xf32> to vector<1x1x1xf32>
    %35 = vector.extract %34[0, 0, 0] : f32 from vector<1x1x1xf32>
    %36 = vector.broadcast %35 : f32 to vector<1x1xf32>
    %c0_10 = arith.constant 0 : index
    %c0_11 = arith.constant 0 : index
    %37 = vector.load %arg4[%c0_10, %c0_11] : memref<8x128xf32, #tpu.memory_space<vmem>>, vector<1x1xf32>
    %38 = arith.addf %37, %36 : vector<1x1xf32>
    %c0_12 = arith.constant 0 : index
    %c0_13 = arith.constant 0 : index
    %39 = vector.load %arg4[%c0_12, %c0_13] : memref<8x128xf32, #tpu.memory_space<vmem>>, vector<1x1xf32>
    tpu.vector_store %arg4[%c0_12, %c0_13], %38 {strides = array<i32>} : memref<8x128xf32, #tpu.memory_space<vmem>>, vector<1x1xf32>,
    return
  }
  func.func @transform_0(%arg0: i32, %arg1: i32) -> (i32, i32) {
    %c1_i32 = arith.constant 1 : i32
    %0 = arith.muli %arg0, %c1_i32 : i32
    %1 = arith.addi %0, %arg1 : i32
    %c0_i32 = arith.constant 0 : i32
    %2 = arith.minsi %1, %c0_i32 : i32
    %c0_i32_0 = arith.constant 0 : i32
    %c0_i32_1 = arith.constant 0 : i32
    return %2, %c0_i32_0 : i32, i32
  }
  func.func @transform_1(%arg0: i32, %arg1: i32) -> (i32, i32) {
    %c1_i32 = arith.constant 1 : i32
    %0 = arith.muli %arg0, %c1_i32 : i32
    %1 = arith.addi %0, %arg1 : i32
    %c0_i32 = arith.constant 0 : i32
    %2 = arith.minsi %1, %c0_i32 : i32
    %c0_i32_0 = arith.constant 0 : i32
    %c0_i32_1 = arith.constant 0 : i32
    return %2, %c0_i32_0 : i32, i32
  }
  func.func @transform_2(%arg0: i32, %arg1: i32) -> (i32, i32) {
    %c0_i32 = arith.constant 0 : i32
    %c0_i32_0 = arith.constant 0 : i32
    return %arg0, %c0_i32 : i32, i32
  }
}

</mosaic_0001>

<llo_original>
// kernel: tpu_custom_call.1
$region0: #{tpu_custom_call.1}
  #allocation0 [shape = 'u32[]', space=smem, size = 0x4, offset = 0x4, fixed_abs, tag = 'smem constant byte address 0x4 - core index']
  #allocation1 [shape = 'u32[144,128]{1,0:T(1,128)}', space=vmem, size = 0x12000, scoped, tag = 'internal scratch']
  %s0 = inlined_call_operand.vmem [shape: bf16[64,10], index: 0, kind: input, shape index: {}]
  %s1 = inlined_call_operand.vmem [shape: s32[64,1], index: 1, kind: input, shape index: {}]
  %s2 = inlined_call_operand.hbm [shape: f32[16,128], index: 2, kind: output, shape index: {}]
  %s3 = sld [smem:[#allocation0]]
  $region45: #{tpu_custom_call.1} parent=0
    _
  %s5 = ssub.s32 1, %s3
  %s6 = scalar_select 0, %s5, %s3
  $region1: #{tpu_custom_call.1} parent=0
    #allocation2 [shape = 'u8[8192]{0}', space=vmem, size = 0x2000, scoped, tag = 'output window, operand 0']
    #allocation3 [shape = 's32[2]{0}', space=sflag, size = 0x8, scoped, tag = 'scoped memory for tpu_custom_call.1']
    %7 = vsyncpa [#allocation3], 0
    %s8 = scalar_lea.sflag [#allocation3], 1
    %9 = vsyncpa %s8, 0
    loop: start=0, step=1, limit=4
    $region2: #{tpu_custom_call.1} parent=1 // loop_pre_header
      _
    $region3: #{tpu_custom_call.1} parent=1 // loop_header
      %s11 = sphi 0, %s15
      %p12 = scmp.ge.s32.totalorder %s11, 4
      %s18 = sphi 0, %s30
      %s19 = sphi 0, %s26
      %s20 = sphi 0, %s18
      %s21 = sphi 0, %s19
      %s22 = sphi 0, %s20
      %s23 = sphi 0, %s21
      %s39 = sphi 0, %s41
      %s42 = sphi 0, %s39
      %s43 = sphi 0, %s42
      %s59 = sphi 0, %s43
      %s71 = sphi 0, %s73
      %s74 = sphi 0, %s71
      %s75 = sphi 0, %s74
      %s91 = sphi 0, %s75
      %s97 = sphi 0, %s99
      %s100 = sphi 0, %s97
      %s101 = sphi 0, %s100
      %s117 = sphi 0, %s101
    $region4: #{tpu_custom_call.1} parent=1 // loop_header_branch
      %14 = sbr.rel (%p12) target = $region8
    $region5: #{tpu_custom_call.1} parent=1 // loop_body
      %s16 = ssub.s32 %s11, 1
      %s17 = ssub.s32 %s11, 2
      %s24 = sadd.s32 1, %s19
      %p25 = scmp.ge.s32.totalorder %s24, 1
      %s26 = scalar_select %p25, 0, %s24
      %s27 = sadd.s32 1, %s18
      %s28 = scalar_select %p25, %s27, %s18
      %p29 = scmp.ge.s32.totalorder %s28, 2
      %s30 = scalar_select %p29, 0, %s28
      %s31 = sadd.s32 %s18, %s19
      %p32 = scmp.lt.s32.totalorder %s31, 0
      %s33 = scalar_select %p32, %s31, 0
      %s34 = sadd.s32 %s30, %s26
      %p35 = scmp.lt.s32.totalorder %s34, 0
      %s36 = scalar_select %p35, %s34, 0
      %s37 = ssub.s32 %s33, %s36
      %p38 = scmp.eq.s32.totalorder %s37, 0
      %s40 = sadd.s32 %s39, 1
      %s41 = scalar_select %p38, %s39, %s40
      %p44 = pneg %p38
      %p45 = scmp.eq.s32.totalorder %s11, 1
      %p46 = por %p44, %p45
      %p47 = scmp.ne.s32.totalorder %s39, %s42
      %p48 = scmp.eq.s32.totalorder %s11, 0
      %p49 = por %p47, %p48
      %p50 = scmp.ne.s32.totalorder %s39, %s42
      %p51 = scmp.eq.s32.totalorder %s16, 1
      %p52 = por %p50, %p51
      %p53 = scmp.ne.s32.totalorder %s42, %s43
      %p54 = scmp.eq.s32.totalorder %s16, 0
      %p55 = por %p53, %p54
      %p56 = scmp.ne.s32.totalorder %s42, %s43
      %p57 = scmp.eq.s32.totalorder %s17, 1
      %p58 = por %p56, %p57
      %p60 = scmp.ne.s32.totalorder %s43, %s59
      %p61 = scmp.eq.s32.totalorder %s17, 0
      %p62 = por %p60, %p61
      %s63 = sadd.s32 %s18, %s19
      %p64 = scmp.lt.s32.totalorder %s63, 0
      %s65 = scalar_select %p64, %s63, 0
      %s66 = sadd.s32 %s30, %s26
      %p67 = scmp.lt.s32.totalorder %s66, 0
      %s68 = scalar_select %p67, %s66, 0
      %s69 = ssub.s32 %s65, %s68
      %p70 = scmp.eq.s32.totalorder %s69, 0
      %s72 = sadd.s32 %s71, 1
      %s73 = scalar_select %p70, %s71, %s72
      %p76 = pneg %p70
      %p77 = scmp.eq.s32.totalorder %s11, 1
      %p78 = por %p76, %p77
      %p79 = scmp.ne.s32.totalorder %s71, %s74
      %p80 = scmp.eq.s32.totalorder %s11, 0
      %p81 = por %p79, %p80
      %p82 = scmp.ne.s32.totalorder %s71, %s74
      %p83 = scmp.eq.s32.totalorder %s16, 1
      %p84 = por %p82, %p83
      %p85 = scmp.ne.s32.totalorder %s74, %s75
      %p86 = scmp.eq.s32.totalorder %s16, 0
      %p87 = por %p85, %p86
      %p88 = scmp.ne.s32.totalorder %s74, %s75
      %p89 = scmp.eq.s32.totalorder %s17, 1
      %p90 = por %p88, %p89
      %p92 = scmp.ne.s32.totalorder %s75, %s91
      %p93 = scmp.eq.s32.totalorder %s17, 0
      %p94 = por %p92, %p93
      %s95 = ssub.s32 %s18, %s30
      %p96 = scmp.eq.s32.totalorder %s95, 0
      %s98 = sadd.s32 %s97, 1
      %s99 = scalar_select %p96, %s97, %s98
      %p102 = pneg %p96
      %p103 = scmp.eq.s32.totalorder %s11, 1
      %p104 = por %p102, %p103
      %p105 = scmp.ne.s32.totalorder %s97, %s100
      %p106 = scmp.eq.s32.totalorder %s11, 0
      %p107 = por %p105, %p106
      %p108 = scmp.ne.s32.totalorder %s97, %s100
      %p109 = scmp.eq.s32.totalorder %s16, 1
      %p110 = por %p108, %p109
      %p111 = scmp.ne.s32.totalorder %s100, %s101
      %p112 = scmp.eq.s32.totalorder %s16, 0
      %p113 = por %p111, %p112
      %p114 = scmp.ne.s32.totalorder %s100, %s101
      %p115 = scmp.eq.s32.totalorder %s17, 1
      %p116 = por %p114, %p115
      %p118 = scmp.ne.s32.totalorder %s101, %s117
      %p119 = scmp.eq.s32.totalorder %s17, 0
      %p120 = por %p118, %p119
      %p121 = scmp.le.s32.totalorder 1, %s11
      %p122 = scmp.lt.s32.totalorder %s11, 3
      %p123 = pnand %p121, %p122
      %p124 = pneg %p123
      // Predicated region
      $region9: #{tpu_custom_call.1} parent=5 // pred_check
        _
      $region10: #{tpu_custom_call.1} parent=5 // pred_check_branch
        %126 = sbr.rel (%p123) target = $region12
      $region11: #{tpu_custom_call.1} parent=5 // pred_region
        %s127 = ssub.s32 %s11, 1
      $region12: #{tpu_custom_call.1} parent=5 // pred_fallthru
        _
      %p128 = scmp.lt.s32.totalorder %s11, 2
      // Predicated region
      $region13: #{tpu_custom_call.1} parent=5 // pred_check
        %p129 = pneg %p128
      $region14: #{tpu_custom_call.1} parent=5 // pred_check_branch
        %131 = sbr.rel (%p129) target = $region16
      $region15: #{tpu_custom_call.1} parent=5 // pred_region
        // Predicated region
        $region17: #{tpu_custom_call.1} parent=15 // pred_check
          %p132 = pneg %p49
        $region18: #{tpu_custom_call.1} parent=15 // pred_check_branch
          %134 = sbr.rel (%p132) target = $region20
        $region19: #{tpu_custom_call.1} parent=15 // pred_region
          %s135 = sadd.s32 %s18, %s19
          %p136 = scmp.lt.s32.totalorder %s135, 0
          %s137 = scalar_select %p136, %s135, 0
          %s138 = smul.u32 8, %s137
          %p139 = scmp.lt.s32.totalorder %s138, 7
          %s140 = scalar_select %p139, %s138, 7
          %s141 = smul.addr %s140, 4
          %s142 = scalar_lea.vmem %s0, %s141
          %s143 = sadd.s32 %s18, %s19
          %p144 = scmp.lt.s32.totalorder %s143, 0
          %s145 = scalar_select %p144, %s143, 0
          %s146 = smul.u32 8, %s145
        $region20: #{tpu_custom_call.1} parent=15 // pred_fallthru
          _
        // Predicated region
        $region21: #{tpu_custom_call.1} parent=15 // pred_check
          %p147 = pneg %p81
        $region22: #{tpu_custom_call.1} parent=15 // pred_check_branch
          %149 = sbr.rel (%p147) target = $region24
        $region23: #{tpu_custom_call.1} parent=15 // pred_region
          %s150 = sadd.s32 %s18, %s19
          %p151 = scmp.lt.s32.totalorder %s150, 0
          %s152 = scalar_select %p151, %s150, 0
          %s153 = smul.u32 8, %s152
          %p154 = scmp.lt.s32.totalorder %s153, 7
          %s155 = scalar_select %p154, %s153, 7
          %s156 = smul.addr %s155, 8
          %s157 = scalar_lea.vmem %s1, %s156
          %s158 = sadd.s32 %s18, %s19
          %p159 = scmp.lt.s32.totalorder %s158, 0
          %s160 = scalar_select %p159, %s158, 0
          %s161 = smul.u32 8, %s160
        $region24: #{tpu_custom_call.1} parent=15 // pred_fallthru
          _
      $region16: #{tpu_custom_call.1} parent=5 // pred_fallthru
        _
      %p162 = scmp.le.s32.totalorder 1, %s11
      %p163 = scmp.lt.s32.totalorder %s11, 3
      %p164 = pnand %p162, %p163
      %p165 = pneg %p164
      // Predicated region
      $region25: #{tpu_custom_call.1} parent=5 // pred_check
        _
      $region26: #{tpu_custom_call.1} parent=5 // pred_check_branch
        %167 = sbr.rel (%p164) target = $region28
      $region27: #{tpu_custom_call.1} parent=5 // pred_region
        %s168 = ssub.s32 %s11, 1
        %s169 = sadd.s32 %s20, %s21
        %p170 = scmp.lt.s32.totalorder %s169, 0
        %s171 = scalar_select %p170, %s169, 0
        %s172 = smul.u32 8, %s171
        %p173 = scmp.lt.s32.totalorder %s172, 7
        %s174 = scalar_select %p173, %s172, 7
        %s175 = smul.addr %s174, 4
        %s176 = scalar_lea.vmem %s0, %s175
        %p177 = pneg %p55
        %p178 = pneg %p52
        %s179 = sadd.s32 %s20, %s21
        %p180 = scmp.lt.s32.totalorder %s179, 0
        %s181 = scalar_select %p180, %s179, 0
        %s182 = smul.u32 8, %s181
        %p183 = scmp.lt.s32.totalorder %s182, 7
        %s184 = scalar_select %p183, %s182, 7
        %s185 = smul.addr %s184, 8
        %s186 = scalar_lea.vmem %s1, %s185
        %p187 = pneg %p87
        %p188 = pneg %p84
        %p189 = pneg %p113
        %p190 = pneg %p110
        %s191 = sand.u32 %s100, 1
        %s192 = scalar_lea.sflag [#allocation3], %s191
        %s193 = sand.u32 %s100, 1
        %s194 = smul.addr %s193, 8
        %s195 = scalar_lea.vmem [#allocation2], %s194
        %s196 = sadd.s32 %s20, %s21
        %p197 = scmp.lt.s32.totalorder %s196, 0
        %s198 = scalar_select %p197, %s196, 0
        %s199 = smul.u32 8, %s198
        %p200 = scmp.lt.s32.totalorder %s199, 7
        %s201 = scalar_select %p200, %s199, 7
        %s202 = smul.addr %s201, 4
        %s203 = scalar_lea.vmem %s0, %s202
        %s204 = sadd.s32 %s20, %s21
        %p205 = scmp.lt.s32.totalorder %s204, 0
        %s206 = scalar_select %p205, %s204, 0
        %s207 = smul.u32 8, %s206
        %s208 = sadd.s32 %s20, %s21
        %p209 = scmp.lt.s32.totalorder %s208, 0
        %s210 = scalar_select %p209, %s208, 0
        %s211 = smul.u32 8, %s210
        %p212 = scmp.lt.s32.totalorder %s211, 7
        %s213 = scalar_select %p212, %s211, 7
        %s214 = smul.addr %s213, 8
        %s215 = scalar_lea.vmem %s1, %s214
        %s216 = sadd.s32 %s20, %s21
        %p217 = scmp.lt.s32.totalorder %s216, 0
        %s218 = scalar_select %p217, %s216, 0
        %s219 = smul.u32 8, %s218
        %p220 = scmp.eq.s32.totalorder %s21, 0
        // Predicated region
        $region29: #{tpu_custom_call.1} parent=27 // pred_check
          %p221 = pneg %p220
        $region30: #{tpu_custom_call.1} parent=27 // pred_check_branch
          %223 = sbr.rel (%p221) target = $region32
        $region31: #{tpu_custom_call.1} parent=27 // pred_region
          %224 = vst [vmem:[%s195] sm:$0xff] 0.0
        $region32: #{tpu_custom_call.1} parent=27 // pred_fallthru
          _
        %v225 = vld [vmem:[%s203] sm:$0xf]
        %v226 = vld [vmem:[%s203 + $0x4] sm:$0xf]
        %v227 = vld [vmem:[%s203 + $0x8] sm:$0xf]
        %v228 = vld [vmem:[%s203 + $0xc] sm:$0xf]
        %v229 = vld [vmem:[%s203 + $0x10] sm:$0xf]
        %v230 = vld [vmem:[%s203 + $0x14] sm:$0xf]
        %v231 = vld [vmem:[%s203 + $0x18] sm:$0xf]
        %v232 = vld [vmem:[%s203 + $0x1c] sm:$0xf]
        %v233 = vunpack.c.l.bf16 %v225
        %v234 = vunpack.c.l.bf16 %v226
        %v235 = vunpack.c.l.bf16 %v227
        %v236 = vunpack.c.l.bf16 %v228
        %v237 = vunpack.c.l.bf16 %v229
        %v238 = vunpack.c.l.bf16 %v230
        %v239 = vunpack.c.l.bf16 %v231
        %v240 = vunpack.c.l.bf16 %v232
        %v241 = vld [vmem:[%s215] sm:$0xff]
        %v242 = vld [vmem:[%s215 + $0x8] sm:$0xff]
        %v243 = vld [vmem:[%s215 + $0x10] sm:$0xff]
        %v244 = vld [vmem:[%s215 + $0x18] sm:$0xff]
        %v245 = vld [vmem:[%s215 + $0x20] sm:$0xff]
        %v246 = vld [vmem:[%s215 + $0x28] sm:$0xff]
        %v247 = vld [vmem:[%s215 + $0x30] sm:$0xff]
        %v248 = vld [vmem:[%s215 + $0x38] sm:$0xff]
        %vm249 = vcmask 80896
        %v250 = vsel %vm249, %v233, -inf
        %251 = vmax.xlane.f32.xlu0 %v250
        %v252 = vpop.xlane.xlu0 %251
        %v253 = vsel %vm249, %v234, -inf
        %254 = vmax.xlane.f32.xlu0 %v253
        %v255 = vpop.xlane.xlu0 %254
        %v256 = vsel %vm249, %v235, -inf
        %257 = vmax.xlane.f32.xlu0 %v256
        %v258 = vpop.xlane.xlu0 %257
        %v259 = vsel %vm249, %v236, -inf
        %260 = vmax.xlane.f32.xlu0 %v259
        %v261 = vpop.xlane.xlu0 %260
        %v262 = vsel %vm249, %v237, -inf
        %263 = vmax.xlane.f32.xlu0 %v262
        %v264 = vpop.xlane.xlu0 %263
        %v265 = vsel %vm249, %v238, -inf
        %266 = vmax.xlane.f32.xlu0 %v265
        %v267 = vpop.xlane.xlu0 %266
        %v268 = vsel %vm249, %v239, -inf
        %269 = vmax.xlane.f32.xlu0 %v268
        %v270 = vpop.xlane.xlu0 %269
        %v271 = vsel %vm249, %v240, -inf
        %272 = vmax.xlane.f32.xlu0 %v271
        %v273 = vpop.xlane.xlu0 %272
        %v274 = vsub.f32 %v233, %v252
        %v275 = vsub.f32 %v234, %v255
        %v276 = vsub.f32 %v235, %v258
        %v277 = vsub.f32 %v236, %v261
        %v278 = vsub.f32 %v237, %v264
        %v279 = vsub.f32 %v238, %v267
        %v280 = vsub.f32 %v239, %v270
        %v281 = vsub.f32 %v240, %v273
        %v282 = vlaneseq
        %v283 = vand.u32 %v282, 127
        %v284 = vmul.f32 %v274, 1.442695
        %v285 = vpow.pop %v284
        %v286 = vmul.f32 %v275, 1.442695
        %v287 = vpow.pop %v286
        %v288 = vmul.f32 %v276, 1.442695
        %v289 = vpow.pop %v288
        %v290 = vmul.f32 %v277, 1.442695
        %v291 = vpow.pop %v290
        %v292 = vmul.f32 %v278, 1.442695
        %v293 = vpow.pop %v292
        %v294 = vmul.f32 %v279, 1.442695
        %v295 = vpow.pop %v294
        %v296 = vmul.f32 %v280, 1.442695
        %v297 = vpow.pop %v296
        %v298 = vmul.f32 %v281, 1.442695
        %v299 = vpow.pop %v298
        %v300 = vsel %vm249, %v285, 0.0
        %301 = vadd.xlane.f32.xlu0 %v300
        %v302 = vpop.xlane.xlu0 %301
        %v303 = vsel %vm249, %v287, 0.0
        %304 = vadd.xlane.f32.xlu0 %v303
        %v305 = vpop.xlane.xlu0 %304
        %v306 = vsel %vm249, %v289, 0.0
        %307 = vadd.xlane.f32.xlu0 %v306
        %v308 = vpop.xlane.xlu0 %307
        %v309 = vsel %vm249, %v291, 0.0
        %310 = vadd.xlane.f32.xlu0 %v309
        %v311 = vpop.xlane.xlu0 %310
        %v312 = vsel %vm249, %v293, 0.0
        %313 = vadd.xlane.f32.xlu0 %v312
        %v314 = vpop.xlane.xlu0 %313
        %v315 = vsel %vm249, %v295, 0.0
        %316 = vadd.xlane.f32.xlu0 %v315
        %v317 = vpop.xlane.xlu0 %316
        %v318 = vsel %vm249, %v297, 0.0
        %319 = vadd.xlane.f32.xlu0 %v318
        %v320 = vpop.xlane.xlu0 %319
        %v321 = vsel %vm249, %v299, 0.0
        %322 = vadd.xlane.f32.xlu0 %v321
        %v323 = vpop.xlane.xlu0 %322
        %324 = vset.pattern.permute.xlu0 0
        %325 = vperm.xlu0 %324, %v241
        %v326 = vpop.permute.xlu0 %325
        %327 = vset.pattern.permute.xlu0 0
        %328 = vperm.xlu0 %327, %v242
        %v329 = vpop.permute.xlu0 %328
        %330 = vset.pattern.permute.xlu0 0
        %331 = vperm.xlu0 %330, %v243
        %v332 = vpop.permute.xlu0 %331
        %333 = vset.pattern.permute.xlu0 0
        %334 = vperm.xlu0 %333, %v244
        %v335 = vpop.permute.xlu0 %334
        %336 = vset.pattern.permute.xlu0 0
        %337 = vperm.xlu0 %336, %v245
        %v338 = vpop.permute.xlu0 %337
        %339 = vset.pattern.permute.xlu0 0
        %340 = vperm.xlu0 %339, %v246
        %v341 = vpop.permute.xlu0 %340
        %342 = vset.pattern.permute.xlu0 0
        %343 = vperm.xlu0 %342, %v247
        %v344 = vpop.permute.xlu0 %343
        %345 = vset.pattern.permute.xlu0 0
        %346 = vperm.xlu0 %345, %v248
        %v347 = vpop.permute.xlu0 %346
        %vm348 = vcmp.eq.s32.totalorder %v283, %v326
        %vm349 = vcmp.eq.s32.totalorder %v283, %v329
        %vm350 = vcmp.eq.s32.totalorder %v283, %v332
        %vm351 = vcmp.eq.s32.totalorder %v283, %v335
        %vm352 = vcmp.eq.s32.totalorder %v283, %v338
        %vm353 = vcmp.eq.s32.totalorder %v283, %v341
        %vm354 = vcmp.eq.s32.totalorder %v283, %v344
        %vm355 = vcmp.eq.s32.totalorder %v283, %v347
        %v356 = vsel %vm348, %v274, 0.0
        %v357 = vsel %vm349, %v275, 0.0
        %v358 = vsel %vm350, %v276, 0.0
        %v359 = vsel %vm351, %v277, 0.0
        %v360 = vsel %vm352, %v278, 0.0
        %v361 = vsel %vm353, %v279, 0.0
        %v362 = vsel %vm354, %v280, 0.0
        %v363 = vsel %vm355, %v281, 0.0
        %v364 = vsel %vm249, %v356, 0.0
        %365 = vadd.xlane.f32.xlu0 %v364
        %v366 = vpop.xlane.xlu0 %365
        %v367 = vsel %vm249, %v357, 0.0
        %368 = vadd.xlane.f32.xlu0 %v367
        %v369 = vpop.xlane.xlu0 %368
        %v370 = vsel %vm249, %v358, 0.0
        %371 = vadd.xlane.f32.xlu0 %v370
        %v372 = vpop.xlane.xlu0 %371
        %v373 = vsel %vm249, %v359, 0.0
        %374 = vadd.xlane.f32.xlu0 %v373
        %v375 = vpop.xlane.xlu0 %374
        %v376 = vsel %vm249, %v360, 0.0
        %377 = vadd.xlane.f32.xlu0 %v376
        %v378 = vpop.xlane.xlu0 %377
        %v379 = vsel %vm249, %v361, 0.0
        %380 = vadd.xlane.f32.xlu0 %v379
        %v381 = vpop.xlane.xlu0 %380
        %v382 = vsel %vm249, %v362, 0.0
        %383 = vadd.xlane.f32.xlu0 %v382
        %v384 = vpop.xlane.xlu0 %383
        %v385 = vsel %vm249, %v363, 0.0
        %386 = vadd.xlane.f32.xlu0 %v385
        %v387 = vpop.xlane.xlu0 %386
        %v388 = vlog2.pop %v302
        %v389 = vmul.f32 %v388, 0.6931472
        %v390 = vlog2.pop %v305
        %v391 = vmul.f32 %v390, 0.6931472
        %v392 = vlog2.pop %v308
        %v393 = vmul.f32 %v392, 0.6931472
        %v394 = vlog2.pop %v311
        %v395 = vmul.f32 %v394, 0.6931472
        %v396 = vlog2.pop %v314
        %v397 = vmul.f32 %v396, 0.6931472
        %v398 = vlog2.pop %v317
        %v399 = vmul.f32 %v398, 0.6931472
        %v400 = vlog2.pop %v320
        %v401 = vmul.f32 %v400, 0.6931472
        %v402 = vlog2.pop %v323
        %v403 = vmul.f32 %v402, 0.6931472
        %v404 = vsub.f32 %v389, %v366
        %v405 = vsub.f32 %v391, %v369
        %v406 = vsub.f32 %v393, %v372
        %v407 = vsub.f32 %v395, %v375
        %v408 = vsub.f32 %v397, %v378
        %v409 = vsub.f32 %v399, %v381
        %v410 = vsub.f32 %v401, %v384
        %v411 = vsub.f32 %v403, %v387
        %s412 = sadd.s32 %s20, %s21
        %s413 = smul.u32 %s412, 64
        %v414 = vlaneseq
        %v415 = vshrl.u32 %v414, 7
        %v416 = vadd.s32 %v415, 8
        %v417 = vadd.s32 %v415, 16
        %v418 = vadd.s32 %v415, 24
        %v419 = vadd.s32 %v415, 32
        %v420 = vadd.s32 %v415, 40
        %v421 = vadd.s32 %v415, 48
        %v422 = vadd.s32 %v415, 56
        %v423 = vstv %s413
        %v424 = vadd.s32 %v423, %v415
        %v425 = vadd.s32 %v423, %v416
        %v426 = vadd.s32 %v423, %v417
        %v427 = vadd.s32 %v423, %v418
        %v428 = vadd.s32 %v423, %v419
        %v429 = vadd.s32 %v423, %v420
        %v430 = vadd.s32 %v423, %v421
        %v431 = vadd.s32 %v423, %v422
        %vm432 = vcmp.lt.s32.totalorder %v424, 64
        %vm433 = vcmp.lt.s32.totalorder %v425, 64
        %vm434 = vcmp.lt.s32.totalorder %v426, 64
        %vm435 = vcmp.lt.s32.totalorder %v427, 64
        %vm436 = vcmp.lt.s32.totalorder %v428, 64
        %vm437 = vcmp.lt.s32.totalorder %v429, 64
        %vm438 = vcmp.lt.s32.totalorder %v430, 64
        %vm439 = vcmp.lt.s32.totalorder %v431, 64
        %v440 = vsel %vm432, %v404, 0.0
        %v441 = vsel %vm433, %v405, 0.0
        %v442 = vsel %vm434, %v406, 0.0
        %v443 = vsel %vm435, %v407, 0.0
        %v444 = vsel %vm436, %v408, 0.0
        %v445 = vsel %vm437, %v409, 0.0
        %v446 = vsel %vm438, %v410, 0.0
        %v447 = vsel %vm439, %v411, 0.0
        %vm448 = vcmask 7168
        %v449 = vsel %vm448, %v440, 0.0
        %v450 = vsel %vm448, %v441, 0.0
        %v451 = vadd.f32 %v449, %v450
        %v452 = vsel %vm448, %v442, 0.0
        %v453 = vadd.f32 %v451, %v452
        %v454 = vsel %vm448, %v443, 0.0
        %v455 = vadd.f32 %v453, %v454
        %v456 = vsel %vm448, %v444, 0.0
        %v457 = vadd.f32 %v455, %v456
        %v458 = vsel %vm448, %v445, 0.0
        %v459 = vadd.f32 %v457, %v458
        %v460 = vsel %vm448, %v446, 0.0
        %v461 = vadd.f32 %v459, %v460
        %v462 = vsel %vm448, %v447, 0.0
        %v463 = vadd.f32 %v461, %v462
        %464 = vadd.xlane.f32.xlu0 %v463
        %v465 = vpop.xlane.xlu0 %464
        %v466 = vrot.slane %v465, 4
        %v467 = vadd.f32 %v465, %v466
        %v468 = vrot.slane %v467, 2
        %v469 = vadd.f32 %v467, %v468
        %v470 = vrot.slane %v469, 1
        %v471 = vadd.f32 %v469, %v470
        %s472 = vtos %v471
        %v473 = vstv %s472
        %v474 = vld [vmem:[%s195] sm:$0x1]
        %v475 = vadd.f32 %v474, %v473
        %vm476 = vcmask 0
        %477 = vst.msk [vmem:[%s195] sm:$0x1] %vm476, %v475
        %s478 = sand.u32 %s100, 1
        %s479 = scalar_lea.sflag [#allocation3], %s478
        %s480 = sand.u32 %s100, 1
        %s481 = smul.addr %s480, 8
        %s482 = scalar_lea.vmem [#allocation2], %s481
        // Predicated region
        $region33: #{tpu_custom_call.1} parent=27 // pred_check
          %p483 = pneg %p110
        $region34: #{tpu_custom_call.1} parent=27 // pred_check_branch
          %485 = sbr.rel (%p483) target = $region36
        $region35: #{tpu_custom_call.1} parent=27 // pred_region
          %s487 = ssub.s32 128, 128
          %488 = vsyncadd %s479, %s487
          %s489 = smul.addr %s20, 128
          %s490 = scalar_lea.hbm %s2, %s489
          %s492 = sshll.u32 %s482, 4
          %s493 = int_to_ptr.vmem [resolvable:$true] %s492
          %495 = dma.vmem_to_hbm [thread:$0]  %s493, 128, %s490, %s479
        $region36: #{tpu_custom_call.1} parent=27 // pred_fallthru
          _
      $region28: #{tpu_custom_call.1} parent=5 // pred_fallthru
        _
      %p496 = scmp.le.s32.totalorder 2, %s11
      // Predicated region
      $region37: #{tpu_custom_call.1} parent=5 // pred_check
        %p497 = pneg %p496
      $region38: #{tpu_custom_call.1} parent=5 // pred_check_branch
        %499 = sbr.rel (%p497) target = $region40
      $region39: #{tpu_custom_call.1} parent=5 // pred_region
        %s500 = ssub.s32 %s11, 2
        // Predicated region
        $region41: #{tpu_custom_call.1} parent=39 // pred_check
          %p501 = pneg %p116
        $region42: #{tpu_custom_call.1} parent=39 // pred_check_branch
          %503 = sbr.rel (%p501) target = $region44
        $region43: #{tpu_custom_call.1} parent=39 // pred_region
          %s504 = sand.u32 %s101, 1
          %s505 = scalar_lea.sflag [#allocation3], %s504
          %s506 = sand.u32 %s101, 1
          %s507 = smul.addr %s506, 8
          %s508 = scalar_lea.vmem [#allocation2], %s507
          %509 = dma.done %s505, 128
        $region44: #{tpu_custom_call.1} parent=39 // pred_fallthru
          _
      $region40: #{tpu_custom_call.1} parent=5 // pred_fallthru
        _
    $region6: #{tpu_custom_call.1} parent=1 // loop_footer
      %s15 = sadd.s32 1, %s11
    $region7: #{tpu_custom_call.1} parent=1 // loop_footer_branch
      %10 = sbr.rel target = $region3
    $region8: #{tpu_custom_call.1} parent=1 // loop_exit
      _
    %510 = vsyncpa [#allocation3], 1
    %s511 = scalar_lea.sflag [#allocation3], 1
    %512 = vsyncpa %s511, 1

</llo_original>
